<compile_context>
chip_gen: v7x
topology: tpu7x:2x2x1
jax: 0.10.0
libtpu: 0.0.40
codegen_flags: <defaults>
</compile_context>

<pallas_src>
import functools

import jax
import jax.numpy as jnp
from jax.experimental import pallas as pl
from jax.experimental.pallas import tpu as pltpu


def _conv_relu_kernel(x_ref, w_ref, b_ref, o_ref):
    """One grid step: a (TN, L, D) slab of review rows for one tower.

    x_ref: (1, TN, L, D)      activations (bf16)
    w_ref: (1, D, K*F)        folded conv weight (bf16); column block k == tap k
    b_ref: (1, 1, F)          bias (f32)
    o_ref: (1, TN, L_out, F)  relu(conv) output (f32), channels-last
    """
    _, TN, L, D = x_ref.shape
    _, _, L_out, F = o_ref.shape
    K = w_ref.shape[2] // F

    # Single wide MXU matmul: (TN*L, D) @ (D, K*F), f32 accumulation.
    # (reshape only merges leading dims; lane dim D is unchanged -> layout-free)
    x = x_ref[0].reshape(TN * L, D)
    y = jnp.dot(x, w_ref[0], preferred_element_type=jnp.float32)   # (TN*L, K*F)
    y = y.reshape(TN, L, K * F)

    # Combine the K shifted taps (static, unrolled) with VPU adds.
    acc = y[:, 0:L_out, 0:F]
    for k in range(1, K):
        acc = acc + y[:, k:k + L_out, k * F:(k + 1) * F]

    acc = acc + b_ref[0]                      # (1, F) broadcast over (TN, L_out, F)
    o_ref[0] = jnp.maximum(acc, 0.0).astype(o_ref.dtype)


@functools.partial(jax.jit, static_argnames=("block_n",))
def conv_relu_pallas(x, w, b, *, block_n=128):
    """Fused user+item windowed conv + bias + ReLU.

    x: (S, N, L, D) f32   (S=2: user / item towers stacked along axis 0)
    w: (S, K, D, F) f32   Conv2d(1, F, (K, word_dim)) weights stored as (K, D, F)
    b: (S, F)       f32
    returns (S, N, L_out, F) f32, channels-last.
    """
    S, N, L, D = x.shape
    _, K, _, F = w.shape
    L_out = L - K + 1

    TN = min(block_n, N)
    n_blocks = pl.cdiv(N, TN)
    N_pad = n_blocks * TN
    if N_pad != N:
        x = jnp.pad(x, ((0, 0), (0, N_pad - N), (0, 0), (0, 0)))

    # Fold (S, K, D, F) -> (S, D, K*F) so column block k corresponds to tap k.
    w_folded = jnp.transpose(w, (0, 2, 1, 3)).reshape(S, D, K * F)

    # bf16 MXU inputs, f32 accumulation / epilogue (v5e VPU/EUP lack bf16).
    x = x.astype(jnp.bfloat16)
    w_folded = w_folded.astype(jnp.bfloat16)
    b = b.astype(jnp.float32).reshape(S, 1, F)

    out = pl.pallas_call(
        _conv_relu_kernel,
        out_shape=jax.ShapeDtypeStruct((S, N_pad, L_out, F), jnp.float32),
        grid_spec=pltpu.PrefetchScalarGridSpec(
            num_scalar_prefetch=0,
            grid=(S, n_blocks),
            in_specs=[
                pl.BlockSpec((1, TN, L, D), lambda s, i: (s, i, 0, 0)),
                pl.BlockSpec((1, D, K * F), lambda s, i: (s, 0, 0)),
                pl.BlockSpec((1, 1, F), lambda s, i: (s, 0, 0)),
            ],
            out_specs=pl.BlockSpec((1, TN, L_out, F), lambda s, i: (s, i, 0, 0)),
        ),
        compiler_params=pltpu.CompilerParams(
            dimension_semantics=("parallel", "parallel")),
    )(x, w_folded, b)

    if N_pad != N:
        out = out[:, :N]
    return out


class NRPAPallas:
    """Deterministic synthetic parameters; mirrors the PyTorch module __init__."""

    def __init__(self, vocab_size, word_dim, user_num, item_num, id_emb_size,
                 filters_num, kernel_size, key):
        ks = jax.random.split(key, 8)
        s = 0.1
        self.kernel_size = kernel_size
        self.user_word_emb = s * jax.random.normal(ks[0], (vocab_size, word_dim), jnp.float32)
        self.item_word_emb = s * jax.random.normal(ks[1], (vocab_size, word_dim), jnp.float32)
        self.user_id_emb = s * jax.random.normal(ks[2], (user_num, id_emb_size), jnp.float32)
        self.item_id_emb = s * jax.random.normal(ks[3], (item_num, id_emb_size), jnp.float32)
        # Conv2d(1, F, (K, word_dim)) weights, stored as (K, D, F); stacked user/item.
        user_w = s * jax.random.normal(ks[4], (kernel_size, word_dim, filters_num), jnp.float32)
        user_b = s * jax.random.normal(ks[5], (filters_num,), jnp.float32)
        item_w = s * jax.random.normal(ks[6], (kernel_size, word_dim, filters_num), jnp.float32)
        item_b = s * jax.random.normal(ks[7], (filters_num,), jnp.float32)
        self.conv_w = jnp.stack([user_w, item_w])   # (2, K, D, F)
        self.conv_b = jnp.stack([user_b, item_b])   # (2, F)

    def forward(self, datas):
        user_reviews, item_reviews, uids, iids = datas[:4]
        bs, r_num, r_len = user_reviews.shape

        # Embedding lookups (plain JAX gather glue).
        # TODO(synk): embedding gather could be fused into the kernel with a
        # scalar-prefetched row gather, but the activation here is small and
        # the batched conv is the dominant cost, so it stays in XLA.
        u_fea = jnp.take(self.user_word_emb, user_reviews, axis=0)   # (bs, r_num, r_len, D)
        i_fea = jnp.take(self.item_word_emb, item_reviews, axis=0)
        u_id_fea = jnp.take(self.user_id_emb, uids, axis=0)          # computed, unused (as in torch)
        i_id_fea = jnp.take(self.item_id_emb, iids, axis=0)
        del u_id_fea, i_id_fea

        # Both towers in one Pallas call (leading axis 0 = user, 1 = item).
        x = jnp.stack([u_fea.reshape(bs * r_num, r_len, -1),
                       i_fea.reshape(bs * r_num, r_len, -1)])        # (2, N, L, D)
        fea = conv_relu_pallas(x, self.conv_w, self.conv_b)

        # Channels-last (N, L_out, F); PyTorch's layout is the transpose of the
        # last two axes. Values are identical; torch forward only prints shape.
        return fea[0], fea[1]


def _reference_conv_relu(x, w, b):
    """Pure-JAX f32 reference, channels-last (N, L_out, F)."""
    K = w.shape[0]
    L_out = x.shape[1] - K + 1
    out = b[None, None, :]
    for k in range(K):
        out = out + jnp.einsum("nld,df->nlf", x[:, k:k + L_out, :], w[k])
    return jnp.maximum(out, 0.0)


if __name__ == "__main__":
    # Small shapes consistent with the module's forward.
    bs, r_num, r_len = 2, 4, 16
    vocab_size, word_dim = 100, 32
    user_num, item_num, id_emb_size = 10, 12, 16
    filters_num, kernel_size = 32, 3

    key = jax.random.PRNGKey(0)
    k_model, k_ur, k_ir, k_uid, k_iid = jax.random.split(key, 5)

    model = NRPAPallas(vocab_size, word_dim, user_num, item_num, id_emb_size,
                       filters_num, kernel_size, k_model)

    user_reviews = jax.random.randint(k_ur, (bs, r_num, r_len), 0, vocab_size, jnp.int32)
    item_reviews = jax.random.randint(k_ir, (bs, r_num, r_len), 0, vocab_size, jnp.int32)
    uids = jax.random.randint(k_uid, (bs,), 0, user_num, jnp.int32)
    iids = jax.random.randint(k_iid, (bs,), 0, item_num, jnp.int32)
    datas = (user_reviews, item_reviews, uids, iids, None, None, None, None)

    u_fea, i_fea = model.forward(datas)
    u_fea = jax.block_until_ready(u_fea)
    i_fea = jax.block_until_ready(i_fea)

    # Verify against the f32 pure-JAX reference (bf16 matmul -> loose tolerance).
    N = bs * r_num
    L_out = r_len - kernel_size + 1
    u_emb = jnp.take(model.user_word_emb, user_reviews, axis=0).reshape(N, r_len, word_dim)
    i_emb = jnp.take(model.item_word_emb, item_reviews, axis=0).reshape(N, r_len, word_dim)
    u_ref = _reference_conv_relu(u_emb, model.conv_w[0], model.conv_b[0])
    i_ref = _reference_conv_relu(i_emb, model.conv_w[1], model.conv_b[1])

    assert u_fea.shape == (N, L_out, filters_num)
    assert i_fea.shape == (N, L_out, filters_num)
    assert jnp.allclose(u_fea, u_ref, atol=2e-2, rtol=2e-2), \
        float(jnp.max(jnp.abs(u_fea - u_ref)))
    assert jnp.allclose(i_fea, i_ref, atol=2e-2, rtol=2e-2), \
        float(jnp.max(jnp.abs(i_fea - i_ref)))

    print("KERNEL_OK")
</pallas_src>

<mosaic_0001>
module attributes {stable_mosaic.version = 11 : i64} {
  func.func @_conv_relu_kernel(%arg0: i32, %arg1: i32, %arg2: memref<1x8x16x32xbf16, #tpu.memory_space<vmem>>, %arg3: memref<1x32x96xbf16, #tpu.memory_space<vmem>>, %arg4: memref<1x1x32xf32, #tpu.memory_space<vmem>>, %arg5: memref<1x8x14x32xf32, #tpu.memory_space<vmem>>) attributes {dimension_semantics = [#tpu.dimension_semantics<parallel>, #tpu.dimension_semantics<parallel>], iteration_bounds = array<i64: 2, 1>, scalar_prefetch = 0 : i64, scratch_operands = 0 : i64, tpu.core_type = #tpu.core_type<tc>, window_params = [{transform_indices = @transform_0, window_bounds = array<i64: 1, 8, 16, 32>}, {transform_indices = @transform_1, window_bounds = array<i64: 1, 32, 96>}, {transform_indices = @transform_2, window_bounds = array<i64: 1, 1, 32>}, {transform_indices = @transform_3, window_bounds = array<i64: 1, 8, 14, 32>}]} {
    %c0 = arith.constant 0 : index
    %c0_0 = arith.constant 0 : index
    %c0_1 = arith.constant 0 : index
    %c0_2 = arith.constant 0 : index
    %0 = vector.load %arg2[%c0, %c0_0, %c0_1, %c0_2] : memref<1x8x16x32xbf16, #tpu.memory_space<vmem>>, vector<1x8x16x32xbf16>
    %1 = vector.shape_cast %0 : vector<1x8x16x32xbf16> to vector<8x16x32xbf16>
    %2 = vector.shape_cast %1 : vector<8x16x32xbf16> to vector<128x32xbf16>
    %c0_3 = arith.constant 0 : index
    %c0_4 = arith.constant 0 : index
    %c0_5 = arith.constant 0 : index
    %3 = vector.load %arg3[%c0_3, %c0_4, %c0_5] : memref<1x32x96xbf16, #tpu.memory_space<vmem>>, vector<1x32x96xbf16>
    %4 = vector.shape_cast %3 : vector<1x32x96xbf16> to vector<32x96xbf16>
    %cst = arith.constant dense<0.000000e+00> : vector<128x96xf32>
    %5 = tpu.matmul %2, %4, %cst {dimension_numbers = #tpu.dot_dimension_numbers<[1], [0], [0], [1], [0, 0, 1, 1], [], []>} : vector<128x32xbf16>, vector<32x96xbf16>, vector<128x96xf32> -> vector<128x96xf32>
    %6 = vector.shape_cast %5 : vector<128x96xf32> to vector<8x16x96xf32>
    %7 = vector.extract_strided_slice %6 {offsets = [0, 0, 0], sizes = [8, 14, 32], strides = [1, 1, 1]} : vector<8x16x96xf32> to vector<8x14x32xf32>
    %8 = vector.extract_strided_slice %6 {offsets = [0, 1, 32], sizes = [8, 14, 32], strides = [1, 1, 1]} : vector<8x16x96xf32> to vector<8x14x32xf32>
    %9 = arith.addf %7, %8 : vector<8x14x32xf32>
    %10 = vector.extract_strided_slice %6 {offsets = [0, 2, 64], sizes = [8, 14, 32], strides = [1, 1, 1]} : vector<8x16x96xf32> to vector<8x14x32xf32>
    %11 = arith.addf %9, %10 : vector<8x14x32xf32>
    %c0_6 = arith.constant 0 : index
    %c0_7 = arith.constant 0 : index
    %c0_8 = arith.constant 0 : index
    %12 = vector.load %arg4[%c0_6, %c0_7, %c0_8] : memref<1x1x32xf32, #tpu.memory_space<vmem>>, vector<1x1x32xf32>
    %13 = vector.shape_cast %12 : vector<1x1x32xf32> to vector<1x32xf32>
    %14 = vector.shape_cast %13 : vector<1x32xf32> to vector<1x1x32xf32>
    %15 = vector.broadcast %14 : vector<1x1x32xf32> to vector<8x14x32xf32>
    %16 = arith.addf %11, %15 : vector<8x14x32xf32>
    %cst_9 = arith.constant 0.000000e+00 : f32
    %17 = vector.broadcast %cst_9 : f32 to vector<8x14x32xf32>
    %18 = arith.maximumf %16, %17 : vector<8x14x32xf32>
    %c0_10 = arith.constant 0 : index
    %c0_11 = arith.constant 0 : index
    %c0_12 = arith.constant 0 : index
    %c0_13 = arith.constant 0 : index
    %19 = vector.load %arg5[%c0_10, %c0_11, %c0_12, %c0_13] : memref<1x8x14x32xf32, #tpu.memory_space<vmem>>, vector<1x8x14x32xf32>
    %20 = vector.shape_cast %19 : vector<1x8x14x32xf32> to vector<8x14x32xf32>
    %21 = vector.shape_cast %18 : vector<8x14x32xf32> to vector<1x8x14x32xf32>
    tpu.vector_store %arg5[%c0_10, %c0_11, %c0_12, %c0_13], %21 {strides = array<i32>} : memref<1x8x14x32xf32, #tpu.memory_space<vmem>>, vector<1x8x14x32xf32>,
    return
  }
  func.func @transform_0(%arg0: i32, %arg1: i32) -> (i32, i32, i32, i32) {
    %c0_i32 = arith.constant 0 : i32
    %c0_i32_0 = arith.constant 0 : i32
    %c0_i32_1 = arith.constant 0 : i32
    return %arg0, %arg1, %c0_i32, %c0_i32_0 : i32, i32, i32, i32
  }
  func.func @transform_1(%arg0: i32, %arg1: i32) -> (i32, i32, i32) {
    %c0_i32 = arith.constant 0 : i32
    %c0_i32_0 = arith.constant 0 : i32
    %c0_i32_1 = arith.constant 0 : i32
    return %arg0, %c0_i32, %c0_i32_0 : i32, i32, i32
  }
  func.func @transform_2(%arg0: i32, %arg1: i32) -> (i32, i32, i32) {
    %c0_i32 = arith.constant 0 : i32
    %c0_i32_0 = arith.constant 0 : i32
    %c0_i32_1 = arith.constant 0 : i32
    return %arg0, %c0_i32, %c0_i32_0 : i32, i32, i32
  }
  func.func @transform_3(%arg0: i32, %arg1: i32) -> (i32, i32, i32, i32) {
    %c0_i32 = arith.constant 0 : i32
    %c0_i32_0 = arith.constant 0 : i32
    %c0_i32_1 = arith.constant 0 : i32
    return %arg0, %arg1, %c0_i32, %c0_i32_0 : i32, i32, i32, i32
  }
}

</mosaic_0001>

<llo_original>
// kernel: conv_relu_pallas.1
$region0: #{conv_relu_pallas.1}
  #allocation0 [shape = 'u32[]', space=smem, size = 0x4, offset = 0x4, fixed_abs, tag = 'smem constant byte address 0x4 - core index']
  #allocation1 [shape = 'u32[144,128]{1,0:T(1,128)}', space=vmem, size = 0x12000, scoped, tag = 'internal scratch']
  %s0 = inlined_call_operand.vmem [shape: bf16[2,8,16,32], index: 0, kind: input, shape index: {}]
  %s1 = inlined_call_operand.vmem [shape: bf16[2,32,96], index: 1, kind: input, shape index: {}]
  %s2 = inlined_call_operand.vmem [shape: f32[2,1,32], index: 2, kind: input, shape index: {}]
  %s3 = inlined_call_operand.vmem [shape: f32[2,8,14,32], index: 3, kind: output, shape index: {}]
  %s4 = sld [smem:[#allocation0]]
  $region45: #{conv_relu_pallas.1} parent=0
    _
  %s6 = ssub.s32 1, %s4
  %s7 = scalar_select 0, %s6, %s4
  loop: start=0, step=1, limit=4
  $region2: #{conv_relu_pallas.1} parent=0 // loop_pre_header
    _
  $region3: #{conv_relu_pallas.1} parent=0 // loop_header
    %s9 = sphi 0, %s13
    %p10 = scmp.ge.s32.totalorder %s9, 4
    %s16 = sphi 0, %s28
    %s17 = sphi 0, %s24
    %s18 = sphi 0, %s16
    %s19 = sphi 0, %s17
    %s20 = sphi 0, %s18
    %s21 = sphi 0, %s19
    %s33 = sphi 0, %s35
    %s36 = sphi 0, %s33
    %s37 = sphi 0, %s36
    %s53 = sphi 0, %s37
    %s59 = sphi 0, %s61
    %s62 = sphi 0, %s59
    %s63 = sphi 0, %s62
    %s79 = sphi 0, %s63
    %s85 = sphi 0, %s87
    %s88 = sphi 0, %s85
    %s89 = sphi 0, %s88
    %s105 = sphi 0, %s89
    %s113 = sphi 0, %s115
    %s116 = sphi 0, %s113
    %s117 = sphi 0, %s116
    %s133 = sphi 0, %s117
  $region4: #{conv_relu_pallas.1} parent=0 // loop_header_branch
    %12 = sbr.rel (%p10) target = $region8
  $region5: #{conv_relu_pallas.1} parent=0 // loop_body
    %s14 = ssub.s32 %s9, 1
    %s15 = ssub.s32 %s9, 2
    %s22 = sadd.s32 1, %s17
    %p23 = scmp.ge.s32.totalorder %s22, 1
    %s24 = scalar_select %p23, 0, %s22
    %s25 = sadd.s32 1, %s16
    %s26 = scalar_select %p23, %s25, %s16
    %p27 = scmp.ge.s32.totalorder %s26, 2
    %s28 = scalar_select %p27, 0, %s26
    %s29 = ssub.s32 %s16, %s28
    %s30 = ssub.s32 %s17, %s24
    %s31 = sor.u32 %s29, %s30
    %p32 = scmp.eq.s32.totalorder %s31, 0
    %s34 = sadd.s32 %s33, 1
    %s35 = scalar_select %p32, %s33, %s34
    %p38 = pneg %p32
    %p39 = scmp.eq.s32.totalorder %s9, 1
    %p40 = por %p38, %p39
    %p41 = scmp.ne.s32.totalorder %s33, %s36
    %p42 = scmp.eq.s32.totalorder %s9, 0
    %p43 = por %p41, %p42
    %p44 = scmp.ne.s32.totalorder %s33, %s36
    %p45 = scmp.eq.s32.totalorder %s14, 1
    %p46 = por %p44, %p45
    %p47 = scmp.ne.s32.totalorder %s36, %s37
    %p48 = scmp.eq.s32.totalorder %s14, 0
    %p49 = por %p47, %p48
    %p50 = scmp.ne.s32.totalorder %s36, %s37
    %p51 = scmp.eq.s32.totalorder %s15, 1
    %p52 = por %p50, %p51
    %p54 = scmp.ne.s32.totalorder %s37, %s53
    %p55 = scmp.eq.s32.totalorder %s15, 0
    %p56 = por %p54, %p55
    %s57 = ssub.s32 %s16, %s28
    %p58 = scmp.eq.s32.totalorder %s57, 0
    %s60 = sadd.s32 %s59, 1
    %s61 = scalar_select %p58, %s59, %s60
    %p64 = pneg %p58
    %p65 = scmp.eq.s32.totalorder %s9, 1
    %p66 = por %p64, %p65
    %p67 = scmp.ne.s32.totalorder %s59, %s62
    %p68 = scmp.eq.s32.totalorder %s9, 0
    %p69 = por %p67, %p68
    %p70 = scmp.ne.s32.totalorder %s59, %s62
    %p71 = scmp.eq.s32.totalorder %s14, 1
    %p72 = por %p70, %p71
    %p73 = scmp.ne.s32.totalorder %s62, %s63
    %p74 = scmp.eq.s32.totalorder %s14, 0
    %p75 = por %p73, %p74
    %p76 = scmp.ne.s32.totalorder %s62, %s63
    %p77 = scmp.eq.s32.totalorder %s15, 1
    %p78 = por %p76, %p77
    %p80 = scmp.ne.s32.totalorder %s63, %s79
    %p81 = scmp.eq.s32.totalorder %s15, 0
    %p82 = por %p80, %p81
    %s83 = ssub.s32 %s16, %s28
    %p84 = scmp.eq.s32.totalorder %s83, 0
    %s86 = sadd.s32 %s85, 1
    %s87 = scalar_select %p84, %s85, %s86
    %p90 = pneg %p84
    %p91 = scmp.eq.s32.totalorder %s9, 1
    %p92 = por %p90, %p91
    %p93 = scmp.ne.s32.totalorder %s85, %s88
    %p94 = scmp.eq.s32.totalorder %s9, 0
    %p95 = por %p93, %p94
    %p96 = scmp.ne.s32.totalorder %s85, %s88
    %p97 = scmp.eq.s32.totalorder %s14, 1
    %p98 = por %p96, %p97
    %p99 = scmp.ne.s32.totalorder %s88, %s89
    %p100 = scmp.eq.s32.totalorder %s14, 0
    %p101 = por %p99, %p100
    %p102 = scmp.ne.s32.totalorder %s88, %s89
    %p103 = scmp.eq.s32.totalorder %s15, 1
    %p104 = por %p102, %p103
    %p106 = scmp.ne.s32.totalorder %s89, %s105
    %p107 = scmp.eq.s32.totalorder %s15, 0
    %p108 = por %p106, %p107
    %s109 = ssub.s32 %s16, %s28
    %s110 = ssub.s32 %s17, %s24
    %s111 = sor.u32 %s109, %s110
    %p112 = scmp.eq.s32.totalorder %s111, 0
    %s114 = sadd.s32 %s113, 1
    %s115 = scalar_select %p112, %s113, %s114
    %p118 = pneg %p112
    %p119 = scmp.eq.s32.totalorder %s9, 1
    %p120 = por %p118, %p119
    %p121 = scmp.ne.s32.totalorder %s113, %s116
    %p122 = scmp.eq.s32.totalorder %s9, 0
    %p123 = por %p121, %p122
    %p124 = scmp.ne.s32.totalorder %s113, %s116
    %p125 = scmp.eq.s32.totalorder %s14, 1
    %p126 = por %p124, %p125
    %p127 = scmp.ne.s32.totalorder %s116, %s117
    %p128 = scmp.eq.s32.totalorder %s14, 0
    %p129 = por %p127, %p128
    %p130 = scmp.ne.s32.totalorder %s116, %s117
    %p131 = scmp.eq.s32.totalorder %s15, 1
    %p132 = por %p130, %p131
    %p134 = scmp.ne.s32.totalorder %s117, %s133
    %p135 = scmp.eq.s32.totalorder %s15, 0
    %p136 = por %p134, %p135
    %p137 = scmp.le.s32.totalorder 1, %s9
    %p138 = scmp.lt.s32.totalorder %s9, 3
    %p139 = pnand %p137, %p138
    %p140 = pneg %p139
    // Predicated region
    $region9: #{conv_relu_pallas.1} parent=5 // pred_check
      _
    $region10: #{conv_relu_pallas.1} parent=5 // pred_check_branch
      %142 = sbr.rel (%p139) target = $region12
    $region11: #{conv_relu_pallas.1} parent=5 // pred_region
      %s143 = ssub.s32 %s9, 1
    $region12: #{conv_relu_pallas.1} parent=5 // pred_fallthru
      _
    %p144 = scmp.lt.s32.totalorder %s9, 2
    // Predicated region
    $region13: #{conv_relu_pallas.1} parent=5 // pred_check
      %p145 = pneg %p144
    $region14: #{conv_relu_pallas.1} parent=5 // pred_check_branch
      %147 = sbr.rel (%p145) target = $region16
    $region15: #{conv_relu_pallas.1} parent=5 // pred_region
      // Predicated region
      $region17: #{conv_relu_pallas.1} parent=15 // pred_check
        %p148 = pneg %p43
      $region18: #{conv_relu_pallas.1} parent=15 // pred_check_branch
        %150 = sbr.rel (%p148) target = $region20
      $region19: #{conv_relu_pallas.1} parent=15 // pred_region
        %s151 = smul.u32 8, %s17
        %p152 = scmp.lt.s32.totalorder %s16, 1
        %s153 = scalar_select %p152, %s16, 1
        %p154 = scmp.lt.s32.totalorder %s151, 7
        %s155 = scalar_select %p154, %s151, 7
        %s156 = smul.addr %s155, 2
        %s157 = smul.addr %s153, 16
        %s158 = sadd.s32 %s156, %s157
        %s159 = smul.addr %s158, 4
        %s160 = scalar_lea.vmem %s0, %s159
        %s161 = smul.u32 8, %s17
      $region20: #{conv_relu_pallas.1} parent=15 // pred_fallthru
        _
      // Predicated region
      $region21: #{conv_relu_pallas.1} parent=15 // pred_check
        %p162 = pneg %p69
      $region22: #{conv_relu_pallas.1} parent=15 // pred_check_branch
        %164 = sbr.rel (%p162) target = $region24
      $region23: #{conv_relu_pallas.1} parent=15 // pred_region
        %p165 = scmp.lt.s32.totalorder %s16, 1
        %s166 = scalar_select %p165, %s16, 1
        %s167 = smul.addr %s166, 4
        %s168 = smul.addr %s167, 4
        %s169 = scalar_lea.vmem %s1, %s168
      $region24: #{conv_relu_pallas.1} parent=15 // pred_fallthru
        _
      // Predicated region
      $region25: #{conv_relu_pallas.1} parent=15 // pred_check
        %p170 = pneg %p95
      $region26: #{conv_relu_pallas.1} parent=15 // pred_check_branch
        %172 = sbr.rel (%p170) target = $region28
      $region27: #{conv_relu_pallas.1} parent=15 // pred_region
        %p173 = scmp.lt.s32.totalorder %s16, 1
        %s174 = scalar_select %p173, %s16, 1
        %s175 = scalar_lea.vmem %s2, %s174
      $region28: #{conv_relu_pallas.1} parent=15 // pred_fallthru
        _
    $region16: #{conv_relu_pallas.1} parent=5 // pred_fallthru
      _
    %p176 = scmp.le.s32.totalorder 1, %s9
    %p177 = scmp.lt.s32.totalorder %s9, 3
    %p178 = pnand %p176, %p177
    %p179 = pneg %p178
    // Predicated region
    $region29: #{conv_relu_pallas.1} parent=5 // pred_check
      _
    $region30: #{conv_relu_pallas.1} parent=5 // pred_check_branch
      %181 = sbr.rel (%p178) target = $region32
    $region31: #{conv_relu_pallas.1} parent=5 // pred_region
      %s182 = ssub.s32 %s9, 1
      %s183 = smul.u32 8, %s19
      %p184 = scmp.lt.s32.totalorder %s18, 1
      %s185 = scalar_select %p184, %s18, 1
      %p186 = scmp.lt.s32.totalorder %s183, 7
      %s187 = scalar_select %p186, %s183, 7
      %s188 = smul.addr %s187, 2
      %s189 = smul.addr %s185, 16
      %s190 = sadd.s32 %s188, %s189
      %s191 = smul.addr %s190, 4
      %s192 = scalar_lea.vmem %s0, %s191
      %p193 = pneg %p49
      %p194 = pneg %p46
      %p195 = scmp.lt.s32.totalorder %s18, 1
      %s196 = scalar_select %p195, %s18, 1
      %s197 = smul.addr %s196, 4
      %s198 = smul.addr %s197, 4
      %s199 = scalar_lea.vmem %s1, %s198
      %p200 = pneg %p75
      %p201 = pneg %p72
      %p202 = scmp.lt.s32.totalorder %s18, 1
      %s203 = scalar_select %p202, %s18, 1
      %s204 = scalar_lea.vmem %s2, %s203
      %p205 = pneg %p101
      %p206 = pneg %p98
      %p207 = pneg %p129
      %p208 = pneg %p126
      %s209 = smul.u32 8, %s19
      %p210 = scmp.lt.s32.totalorder %s18, 1
      %s211 = scalar_select %p210, %s18, 1
      %p212 = scmp.lt.s32.totalorder %s209, 7
      %s213 = scalar_select %p212, %s209, 7
      %s214 = smul.addr %s213, 2
      %s215 = smul.addr %s211, 16
      %s216 = sadd.s32 %s214, %s215
      %s217 = smul.addr %s216, 8
      %s218 = scalar_lea.vmem %s3, %s217
      %s219 = smul.u32 8, %s19
      %p220 = scmp.lt.s32.totalorder %s18, 1
      %s221 = scalar_select %p220, %s18, 1
      %p222 = scmp.lt.s32.totalorder %s219, 7
      %s223 = scalar_select %p222, %s219, 7
      %s224 = smul.addr %s223, 2
      %s225 = smul.addr %s221, 16
      %s226 = sadd.s32 %s224, %s225
      %s227 = smul.addr %s226, 4
      %s228 = scalar_lea.vmem %s0, %s227
      %s229 = smul.u32 8, %s19
      %p230 = scmp.lt.s32.totalorder %s18, 1
      %s231 = scalar_select %p230, %s18, 1
      %s232 = smul.addr %s231, 4
      %s233 = smul.addr %s232, 4
      %s234 = scalar_lea.vmem %s1, %s233
      %p235 = scmp.lt.s32.totalorder %s18, 1
      %s236 = scalar_select %p235, %s18, 1
      %s237 = scalar_lea.vmem %s2, %s236
      %s238 = smul.u32 8, %s19
      %p239 = scmp.lt.s32.totalorder %s18, 1
      %s240 = scalar_select %p239, %s18, 1
      %p241 = scmp.lt.s32.totalorder %s238, 7
      %s242 = scalar_select %p241, %s238, 7
      %s243 = smul.addr %s242, 2
      %s244 = smul.addr %s240, 16
      %s245 = sadd.s32 %s243, %s244
      %s246 = smul.addr %s245, 8
      %s247 = scalar_lea.vmem %s3, %s246
      %s248 = smul.u32 8, %s19
      %v250 = vld [vmem:[%s228] sm:$0xf]
      %v251 = vld [vmem:[%s228 + $0x4] sm:$0xf]
      %v252 = vld [vmem:[%s228 + $0x8] sm:$0xf]
      %v253 = vld [vmem:[%s228 + $0xc] sm:$0xf]
      %v254 = vld [vmem:[%s228 + $0x10] sm:$0xf]
      %v255 = vld [vmem:[%s228 + $0x14] sm:$0xf]
      %v256 = vld [vmem:[%s228 + $0x18] sm:$0xf]
      %v257 = vld [vmem:[%s228 + $0x1c] sm:$0xf]
      %v258 = vld [vmem:[%s228 + $0x20] sm:$0xf]
      %v259 = vld [vmem:[%s228 + $0x24] sm:$0xf]
      %v260 = vld [vmem:[%s228 + $0x28] sm:$0xf]
      %v261 = vld [vmem:[%s228 + $0x2c] sm:$0xf]
      %v262 = vld [vmem:[%s228 + $0x30] sm:$0xf]
      %v263 = vld [vmem:[%s228 + $0x34] sm:$0xf]
      %v264 = vld [vmem:[%s228 + $0x38] sm:$0xf]
      %v265 = vld [vmem:[%s228 + $0x3c] sm:$0xf]
      %v266 = vld [vmem:[%s234] sm:$0xf]
      %v267 = vld [vmem:[%s234 + $0x4] sm:$0xf]
      %v268 = vld [vmem:[%s234 + $0x8] sm:$0xf]
      %v269 = vld [vmem:[%s234 + $0xc] sm:$0xf]
      %v286 = vunpack.c.l.b16 %v250
      %v287 = vunpack.c.l.b16 %v251
      %v288 = vunpack.c.l.b16 %v252
      %v289 = vunpack.c.l.b16 %v253
      %v290 = vunpack.c.l.b16 %v254
      %v291 = vunpack.c.l.b16 %v255
      %v292 = vunpack.c.l.b16 %v256
      %v293 = vunpack.c.l.b16 %v257
      %v294 = vunpack.c.l.b16 %v258
      %v295 = vunpack.c.l.b16 %v259
      %v296 = vunpack.c.l.b16 %v260
      %v297 = vunpack.c.l.b16 %v261
      %v298 = vunpack.c.l.b16 %v262
      %v299 = vunpack.c.l.b16 %v263
      %v300 = vunpack.c.l.b16 %v264
      %v301 = vunpack.c.l.b16 %v265
      %v302 = vpack.c.b16 %v287, %v286
      %v303 = vpack.c.b16 %v289, %v288
      %v304 = vpack.c.b16 %v291, %v290
      %v305 = vpack.c.b16 %v293, %v292
      %v306 = vpack.c.b16 %v295, %v294
      %v307 = vpack.c.b16 %v297, %v296
      %v308 = vpack.c.b16 %v299, %v298
      %v309 = vpack.c.b16 %v301, %v300
      %v314 = vunpack.c.l.b16 %v266
      %v315 = vunpack.c.l.b16 %v267
      %v316 = vunpack.c.l.b16 %v268
      %v317 = vunpack.c.l.b16 %v269
      %v318 = vpack.c.b16 %v315, %v314
      %v319 = vpack.c.b16 %v317, %v316
      %vm322 = vcmask 261120
      %v324 = vsel %vm322, %v302, 0
      %v327 = vsel %vm322, %v303, 0
      %v330 = vsel %vm322, %v304, 0
      %v333 = vsel %vm322, %v305, 0
      %v336 = vsel %vm322, %v306, 0
      %v339 = vsel %vm322, %v307, 0
      %v342 = vsel %vm322, %v308, 0
      %v345 = vsel %vm322, %v309, 0
      %347 = vmatprep.subr.bf16.mxu0 0
      %348 = vmatpush1.bf16.msra.mxu0 %v318
      %349 = vmatprep.subr.bf16.mxu0 0
      %350 = vmatpush1.bf16.msra.mxu0 %v319
      %351 = vmatprep.subr.bf16.mxu0 0
      %352 = vmatpush1.bf16.msra.mxu0 0
      %353 = vmatprep.subr.bf16.mxu0 0
      %354 = vmatpush1.bf16.msra.mxu0 0
      %355 = vmatprep.subr.bf16.mxu0 0
      %356 = vmatpush1.bf16.msra.mxu0 0
      %357 = vmatprep.subr.bf16.mxu0 0
      %358 = vmatpush1.bf16.msra.mxu0 0
      %359 = vmatprep.subr.bf16.mxu0 0
      %360 = vmatpush1.bf16.msra.mxu0 0
      %361 = vmatprep.subr.bf16.mxu0 0
      %362 = vmatpush1.bf16.msra.mxu0 0
      %363 = vmatprep.subr.bf16.mxu0 0
      %364 = vmatpush1.bf16.msra.mxu0 0
      %365 = vmatprep.subr.bf16.mxu0 0
      %366 = vmatpush1.bf16.msra.mxu0 0
      %367 = vmatprep.subr.bf16.mxu0 0
      %368 = vmatpush1.bf16.msra.mxu0 0
      %369 = vmatprep.subr.bf16.mxu0 0
      %370 = vmatpush1.bf16.msra.mxu0 0
      %371 = vmatprep.subr.bf16.mxu0 0
      %372 = vmatpush1.bf16.msra.mxu0 0
      %373 = vmatprep.subr.bf16.mxu0 0
      %374 = vmatpush1.bf16.msra.mxu0 0
      %375 = vmatprep.subr.bf16.mxu0 0
      %376 = vmatpush1.bf16.msra.mxu0 0
      %377 = vmatprep.subr.bf16.mxu0 0
      %378 = vmatpush1.bf16.msra.mxu0 0
      %379 = vmatprep.mubr.bf16.mxu0 0
      %380 = vmatmul.mubr.bf16.gmra.mrb[0].mxu0 %v324
      %v381 = vpop.f32.mrb[0].mxu0
      %v382 = vadd.f32 0.0, %v381
      %v383 = vpop.f32.mrb[0].mxu0
      %v384 = vpop.f32.mrb[0].mxu0
      %v385 = vadd.f32 0.0, %v384
      %v386 = vpop.f32.mrb[0].mxu0
      %387 = vmatprep.mubr.bf16.mxu0 0
      %388 = vmatmul.mubr.bf16.gmra.mrb[0].mxu0 %v327
      %v389 = vpop.f32.mrb[0].mxu0
      %v390 = vadd.f32 0.0, %v389
      %v391 = vpop.f32.mrb[0].mxu0
      %v392 = vpop.f32.mrb[0].mxu0
      %v393 = vadd.f32 0.0, %v392
      %v394 = vpop.f32.mrb[0].mxu0
      %395 = vmatprep.mubr.bf16.mxu0 0
      %396 = vmatmul.mubr.bf16.gmra.mrb[0].mxu0 %v330
      %v397 = vpop.f32.mrb[0].mxu0
      %v398 = vadd.f32 0.0, %v397
      %v399 = vpop.f32.mrb[0].mxu0
      %v400 = vpop.f32.mrb[0].mxu0
      %v401 = vadd.f32 0.0, %v400
      %v402 = vpop.f32.mrb[0].mxu0
      %403 = vmatprep.mubr.bf16.mxu0 0
      %404 = vmatmul.mubr.bf16.gmra.mrb[0].mxu0 %v333
      %v405 = vpop.f32.mrb[0].mxu0
      %v406 = vadd.f32 0.0, %v405
      %v407 = vpop.f32.mrb[0].mxu0
      %v408 = vpop.f32.mrb[0].mxu0
      %v409 = vadd.f32 0.0, %v408
      %v410 = vpop.f32.mrb[0].mxu0
      %411 = vmatprep.mubr.bf16.mxu0 0
      %412 = vmatmul.mubr.bf16.gmra.mrb[0].mxu0 %v336
      %v413 = vpop.f32.mrb[0].mxu0
      %v414 = vadd.f32 0.0, %v413
      %v415 = vpop.f32.mrb[0].mxu0
      %v416 = vpop.f32.mrb[0].mxu0
      %v417 = vadd.f32 0.0, %v416
      %v418 = vpop.f32.mrb[0].mxu0
      %419 = vmatprep.mubr.bf16.mxu0 0
      %420 = vmatmul.mubr.bf16.gmra.mrb[0].mxu0 %v339
      %v421 = vpop.f32.mrb[0].mxu0
      %v422 = vadd.f32 0.0, %v421
      %v423 = vpop.f32.mrb[0].mxu0
      %v424 = vpop.f32.mrb[0].mxu0
      %v425 = vadd.f32 0.0, %v424
      %v426 = vpop.f32.mrb[0].mxu0
      %427 = vmatprep.mubr.bf16.mxu0 0
      %428 = vmatmul.mubr.bf16.gmra.mrb[0].mxu0 %v342
      %v429 = vpop.f32.mrb[0].mxu0
      %v430 = vadd.f32 0.0, %v429
      %v431 = vpop.f32.mrb[0].mxu0
      %v432 = vpop.f32.mrb[0].mxu0
      %v433 = vadd.f32 0.0, %v432
      %v434 = vpop.f32.mrb[0].mxu0
      %435 = vmatprep.mubr.bf16.mxu0 0
      %436 = vmatmul.mubr.bf16.gmra.mrb[0].mxu0 %v345
      %v437 = vpop.f32.mrb[0].mxu0
      %v438 = vadd.f32 0.0, %v437
      %v439 = vpop.f32.mrb[0].mxu0
      %v440 = vpop.f32.mrb[0].mxu0
      %v441 = vadd.f32 0.0, %v440
      %v442 = vpop.f32.mrb[0].mxu0
      %443 = vdwg.mxu0
      %vm460 = vcmask 1046528
      %v461 = vrot.slane %v382, 1
      %v462 = vrot.slane %v385, 1
      %v463 = vsel %vm460, %v461, %v462
      %v464 = vrot.slane %v390, 1
      %v465 = vrot.slane %v393, 1
      %v466 = vsel %vm460, %v464, %v465
      %v467 = vrot.slane %v398, 1
      %v468 = vrot.slane %v401, 1
      %v469 = vsel %vm460, %v467, %v468
      %v470 = vrot.slane %v406, 1
      %v471 = vrot.slane %v409, 1
      %v472 = vsel %vm460, %v470, %v471
      %v473 = vrot.slane %v414, 1
      %v474 = vrot.slane %v417, 1
      %v475 = vsel %vm460, %v473, %v474
      %v476 = vrot.slane %v422, 1
      %v477 = vrot.slane %v425, 1
      %v478 = vsel %vm460, %v476, %v477
      %v479 = vrot.slane %v430, 1
      %v480 = vrot.slane %v433, 1
      %v481 = vsel %vm460, %v479, %v480
      %v482 = vrot.slane %v438, 1
      %v483 = vrot.slane %v441, 1
      %v484 = vsel %vm460, %v482, %v483
      %485 = vrot.lane.b32.xlu0 %v463, 96
      %v486 = vpop.permute.xlu0 %485
      %487 = vrot.lane.b32.xlu0 %v462, 96
      %v488 = vpop.permute.xlu0 %487
      %489 = vrot.lane.b32.xlu0 %v466, 96
      %v490 = vpop.permute.xlu0 %489
      %491 = vrot.lane.b32.xlu0 %v465, 96
      %v492 = vpop.permute.xlu0 %491
      %493 = vrot.lane.b32.xlu0 %v469, 96
      %v494 = vpop.permute.xlu0 %493
      %495 = vrot.lane.b32.xlu0 %v468, 96
      %v496 = vpop.permute.xlu0 %495
      %497 = vrot.lane.b32.xlu0 %v472, 96
      %v498 = vpop.permute.xlu0 %497
      %499 = vrot.lane.b32.xlu0 %v471, 96
      %v500 = vpop.permute.xlu0 %499
      %501 = vrot.lane.b32.xlu0 %v475, 96
      %v502 = vpop.permute.xlu0 %501
      %503 = vrot.lane.b32.xlu0 %v474, 96
      %v504 = vpop.permute.xlu0 %503
      %505 = vrot.lane.b32.xlu0 %v478, 96
      %v506 = vpop.permute.xlu0 %505
      %507 = vrot.lane.b32.xlu0 %v477, 96
      %v508 = vpop.permute.xlu0 %507
      %509 = vrot.lane.b32.xlu0 %v481, 96
      %v510 = vpop.permute.xlu0 %509
      %511 = vrot.lane.b32.xlu0 %v480, 96
      %v512 = vpop.permute.xlu0 %511
      %513 = vrot.lane.b32.xlu0 %v484, 96
      %v514 = vpop.permute.xlu0 %513
      %515 = vrot.lane.b32.xlu0 %v483, 96
      %v516 = vpop.permute.xlu0 %515
      %v533 = vadd.f32 %v382, %v486
      %v534 = vadd.f32 %v385, %v488
      %v535 = vadd.f32 %v390, %v490
      %v536 = vadd.f32 %v393, %v492
      %v537 = vadd.f32 %v398, %v494
      %v538 = vadd.f32 %v401, %v496
      %v539 = vadd.f32 %v406, %v498
      %v540 = vadd.f32 %v409, %v500
      %v541 = vadd.f32 %v414, %v502
      %v542 = vadd.f32 %v417, %v504
      %v543 = vadd.f32 %v422, %v506
      %v544 = vadd.f32 %v425, %v508
      %v545 = vadd.f32 %v430, %v510
      %v546 = vadd.f32 %v433, %v512
      %v547 = vadd.f32 %v438, %v514
      %v548 = vadd.f32 %v441, %v516
      %vm549 = vcmask 1045504
      %v550 = vrot.slane %v382, 2
      %v551 = vrot.slane %v385, 2
      %v552 = vsel %vm549, %v550, %v551
      %v553 = vrot.slane %v390, 2
      %v554 = vrot.slane %v393, 2
      %v555 = vsel %vm549, %v553, %v554
      %v556 = vrot.slane %v398, 2
      %v557 = vrot.slane %v401, 2
      %v558 = vsel %vm549, %v556, %v557
      %v559 = vrot.slane %v406, 2
      %v560 = vrot.slane %v409, 2
      %v561 = vsel %vm549, %v559, %v560
      %v562 = vrot.slane %v414, 2
      %v563 = vrot.slane %v417, 2
      %v564 = vsel %vm549, %v562, %v563
      %v565 = vrot.slane %v422, 2
      %v566 = vrot.slane %v425, 2
      %v567 = vsel %vm549, %v565, %v566
      %v568 = vrot.slane %v430, 2
      %v569 = vrot.slane %v433, 2
      %v570 = vsel %vm549, %v568, %v569
      %v571 = vrot.slane %v438, 2
      %v572 = vrot.slane %v441, 2
      %v573 = vsel %vm549, %v571, %v572
      %574 = vrot.lane.b32.xlu0 %v552, 64
      %v575 = vpop.permute.xlu0 %574
      %576 = vrot.lane.b32.xlu0 %v551, 64
      %v577 = vpop.permute.xlu0 %576
      %578 = vrot.lane.b32.xlu0 %v555, 64
      %v579 = vpop.permute.xlu0 %578
      %580 = vrot.lane.b32.xlu0 %v554, 64
      %v581 = vpop.permute.xlu0 %580
      %582 = vrot.lane.b32.xlu0 %v558, 64
      %v583 = vpop.permute.xlu0 %582
      %584 = vrot.lane.b32.xlu0 %v557, 64
      %v585 = vpop.permute.xlu0 %584
      %586 = vrot.lane.b32.xlu0 %v561, 64
      %v587 = vpop.permute.xlu0 %586
      %588 = vrot.lane.b32.xlu0 %v560, 64
      %v589 = vpop.permute.xlu0 %588
      %590 = vrot.lane.b32.xlu0 %v564, 64
      %v591 = vpop.permute.xlu0 %590
      %592 = vrot.lane.b32.xlu0 %v563, 64
      %v593 = vpop.permute.xlu0 %592
      %594 = vrot.lane.b32.xlu0 %v567, 64
      %v595 = vpop.permute.xlu0 %594
      %596 = vrot.lane.b32.xlu0 %v566, 64
      %v597 = vpop.permute.xlu0 %596
      %598 = vrot.lane.b32.xlu0 %v570, 64
      %v599 = vpop.permute.xlu0 %598
      %600 = vrot.lane.b32.xlu0 %v569, 64
      %v601 = vpop.permute.xlu0 %600
      %602 = vrot.lane.b32.xlu0 %v573, 64
      %v603 = vpop.permute.xlu0 %602
      %604 = vrot.lane.b32.xlu0 %v572, 64
      %v605 = vpop.permute.xlu0 %604
      %v622 = vadd.f32 %v533, %v575
      %v623 = vadd.f32 %v534, %v577
      %v624 = vadd.f32 %v535, %v579
      %v625 = vadd.f32 %v536, %v581
      %v626 = vadd.f32 %v537, %v583
      %v627 = vadd.f32 %v538, %v585
      %v628 = vadd.f32 %v539, %v587
      %v629 = vadd.f32 %v540, %v589
      %v630 = vadd.f32 %v541, %v591
      %v631 = vadd.f32 %v542, %v593
      %v632 = vadd.f32 %v543, %v595
      %v633 = vadd.f32 %v544, %v597
      %v634 = vadd.f32 %v545, %v599
      %v635 = vadd.f32 %v546, %v601
      %v636 = vadd.f32 %v547, %v603
      %v637 = vadd.f32 %v548, %v605
      %v638 = vld [vmem:[%s237] sm:$0x1]
      %v640 = vlaneseq
      %v641 = vshrl.u32 %v640, 7
      %v642 = vsub.s32 0, %v641
      %v643 = vrot.slane %v638, %v642
      %v645 = vadd.f32 %v622, %v643
      %v646 = vadd.f32 %v623, %v643
      %v647 = vadd.f32 %v624, %v643
      %v648 = vadd.f32 %v625, %v643
      %v649 = vadd.f32 %v626, %v643
      %v650 = vadd.f32 %v627, %v643
      %v651 = vadd.f32 %v628, %v643
      %v652 = vadd.f32 %v629, %v643
      %v653 = vadd.f32 %v630, %v643
      %v654 = vadd.f32 %v631, %v643
      %v655 = vadd.f32 %v632, %v643
      %v656 = vadd.f32 %v633, %v643
      %v657 = vadd.f32 %v634, %v643
      %v658 = vadd.f32 %v635, %v643
      %v659 = vadd.f32 %v636, %v643
      %v660 = vadd.f32 %v637, %v643
      %v661 = vmax.f32 %v645, 0.0
      %v662 = vmax.f32 %v646, 0.0
      %v663 = vmax.f32 %v647, 0.0
      %v664 = vmax.f32 %v648, 0.0
      %v665 = vmax.f32 %v649, 0.0
      %v666 = vmax.f32 %v650, 0.0
      %v667 = vmax.f32 %v651, 0.0
      %v668 = vmax.f32 %v652, 0.0
      %v669 = vmax.f32 %v653, 0.0
      %v670 = vmax.f32 %v654, 0.0
      %v671 = vmax.f32 %v655, 0.0
      %v672 = vmax.f32 %v656, 0.0
      %v673 = vmax.f32 %v657, 0.0
      %v674 = vmax.f32 %v658, 0.0
      %v675 = vmax.f32 %v659, 0.0
      %v676 = vmax.f32 %v660, 0.0
      %677 = vst.msk [vmem:[%s247] sm:$0xff] %vm322, %v661
      %vm678 = vcmask 259072
      %679 = vst.msk [vmem:[%s247 + $0x8] sm:$0x3f] %vm678, %v662
      %680 = vst.msk [vmem:[%s247 + $0x10] sm:$0xff] %vm322, %v663
      %681 = vst.msk [vmem:[%s247 + $0x18] sm:$0x3f] %vm678, %v664
      %682 = vst.msk [vmem:[%s247 + $0x20] sm:$0xff] %vm322, %v665
      %683 = vst.msk [vmem:[%s247 + $0x28] sm:$0x3f] %vm678, %v666
      %684 = vst.msk [vmem:[%s247 + $0x30] sm:$0xff] %vm322, %v667
      %685 = vst.msk [vmem:[%s247 + $0x38] sm:$0x3f] %vm678, %v668
      %686 = vst.msk [vmem:[%s247 + $0x40] sm:$0xff] %vm322, %v669
      %687 = vst.msk [vmem:[%s247 + $0x48] sm:$0x3f] %vm678, %v670
      %688 = vst.msk [vmem:[%s247 + $0x50] sm:$0xff] %vm322, %v671
      %689 = vst.msk [vmem:[%s247 + $0x58] sm:$0x3f] %vm678, %v672
      %690 = vst.msk [vmem:[%s247 + $0x60] sm:$0xff] %vm322, %v673
      %691 = vst.msk [vmem:[%s247 + $0x68] sm:$0x3f] %vm678, %v674
      %692 = vst.msk [vmem:[%s247 + $0x70] sm:$0xff] %vm322, %v675
      %693 = vst.msk [vmem:[%s247 + $0x78] sm:$0x3f] %vm678, %v676
      %s694 = smul.u32 8, %s19
      %p695 = scmp.lt.s32.totalorder %s18, 1
      %s696 = scalar_select %p695, %s18, 1
      %p697 = scmp.lt.s32.totalorder %s694, 7
      %s698 = scalar_select %p697, %s694, 7
      %s699 = smul.addr %s698, 2
      %s700 = smul.addr %s696, 16
      %s701 = sadd.s32 %s699, %s700
      %s702 = smul.addr %s701, 8
      %s703 = scalar_lea.vmem %s3, %s702
      // Predicated region
      $region33: #{conv_relu_pallas.1} parent=31 // pred_check
        %p704 = pneg %p126
      $region34: #{conv_relu_pallas.1} parent=31 // pred_check_branch
        %706 = sbr.rel (%p704) target = $region36
      $region35: #{conv_relu_pallas.1} parent=31 // pred_region
        %s707 = smul.u32 8, %s19
      $region36: #{conv_relu_pallas.1} parent=31 // pred_fallthru
        _
    $region32: #{conv_relu_pallas.1} parent=5 // pred_fallthru
      _
    %p708 = scmp.le.s32.totalorder 2, %s9
    // Predicated region
    $region37: #{conv_relu_pallas.1} parent=5 // pred_check
      %p709 = pneg %p708
    $region38: #{conv_relu_pallas.1} parent=5 // pred_check_branch
      %711 = sbr.rel (%p709) target = $region40
    $region39: #{conv_relu_pallas.1} parent=5 // pred_region
      %s712 = ssub.s32 %s9, 2
      // Predicated region
      $region41: #{conv_relu_pallas.1} parent=39 // pred_check
        %p713 = pneg %p132
      $region42: #{conv_relu_pallas.1} parent=39 // pred_check_branch
        %715 = sbr.rel (%p713) target = $region44
      $region43: #{conv_relu_pallas.1} parent=39 // pred_region
        %s716 = smul.u32 8, %s21
        %p717 = scmp.lt.s32.totalorder %s20, 1
        %s718 = scalar_select %p717, %s20, 1
        %p719 = scmp.lt.s32.totalorder %s716, 7
        %s720 = scalar_select %p719, %s716, 7
        %s721 = smul.addr %s720, 2
        %s722 = smul.addr %s718, 16
        %s723 = sadd.s32 %s721, %s722
        %s724 = smul.addr %s723, 8
        %s725 = scalar_lea.vmem %s3, %s724
      $region44: #{conv_relu_pallas.1} parent=39 // pred_fallthru
        _
    $region40: #{conv_relu_pallas.1} parent=5 // pred_fallthru
      _
  $region6: #{conv_relu_pallas.1} parent=0 // loop_footer
    %s13 = sadd.s32 1, %s9
  $region7: #{conv_relu_pallas.1} parent=0 // loop_footer_branch
    %8 = sbr.rel target = $region3
  $region8: #{conv_relu_pallas.1} parent=0 // loop_exit
    _

</llo_original>
